<compile_context>
chip_gen: v5e
topology: v5e:2x2
jax: 0.10.0
libtpu: 0.0.40
codegen_flags: <defaults>
</compile_context>

<pallas_src>
import functools

import jax
import jax.numpy as jnp
import numpy as np
from jax import lax
from jax.experimental import pallas as pl

_CPAD = 8      # channels padded to one sublane tile
_LPAD = 128    # lane halo padding (>= max tap offset of W+1, kept 128-aligned)


def _depth_kernel(x_ref, masks_ref, w1_ref, b1_ref, w2_ref, b2_ref, o_ref,
                  *, shifts, m_total, m_frame):
    # x_ref    : (8, M)     channels-first input, frames stacked on the lane axis
    # masks_ref: (9, M)     per-tap zero-padding validity masks (0./1.)
    # w1_ref   : (8, 72)    conv1 weights, im2col layout (tap-major, cin-minor)
    # b1_ref   : (8, 1)     conv1 bias
    # w2_ref   : (8, 72)    conv2 weights in row 0, rows 1..7 zero (MXU-friendly M)
    # b2_ref   : (1, 1)     conv2 bias
    # o_ref    : (1, H*W)   mean depth over the two frames (lane-dense store)
    zeros_halo = jnp.zeros((_CPAD, _LPAD), jnp.float32)
    masks = masks_ref[...]

    def im2col(src):
        # src (8, M) -> (72, M).  Rows are tap-major / channel-minor.  A tap
        # that falls outside the frame (the conv's zero padding) is zeroed by
        # its mask, so the zero-extended buffer only needs to make the static
        # lane slices in-bounds -- no scratch, no unaligned stores.
        ext = jnp.concatenate([zeros_halo, src, zeros_halo], axis=1)
        blocks = []
        for t, s in enumerate(shifts):
            blocks.append(ext[:, s:s + m_total] * masks[t:t + 1, :])
        return jnp.concatenate(blocks, axis=0)

    # conv1 (3x3, pad=1, Cin->C) + ReLU : one MXU matmul, K=72, N=M.
    hidden = jnp.dot(w1_ref[...], im2col(x_ref[...]),
                     preferred_element_type=jnp.float32) + b1_ref[...]
    hidden = jnp.maximum(hidden, 0.0)

    # conv2 (3x3, pad=1, C->1) : one MXU matmul; row 0 carries the real output.
    depth = jnp.dot(w2_ref[...], im2col(hidden),
                    preferred_element_type=jnp.float32)

    # mean over the two frames (+ conv2 bias), single lane-dense store.
    o_ref[...] = 0.5 * (depth[0:1, :m_frame] + depth[0:1, m_frame:]) + b2_ref[...]


def depth_projection_forward(x_nhwc, w1, b1, w2, b2):
    """Forward pass of DepthProjectionModule.

    x_nhwc: (2, H, W, Cin) float32 -- the two frames (pre-`transpose1323`
            layout; the kernel works channels-first internally, equivalently).
    w1, b1, w2, b2: stand-in depth-net parameters, conv weights in HWIO layout.
    Returns the (H, W) float32 mean depth map (== torch.squeeze(p[0])).
    """
    n, h, w, cin = x_nhwc.shape
    assert n == 2, "DepthProjectionModule consumes exactly two frames"
    c = w1.shape[3]
    assert cin <= _CPAD and c == _CPAD
    mf = h * w                 # per-frame flattened spatial size (lane axis)
    m = n * mf                 # both frames on the lane axis
    k = 9 * _CPAD              # im2col contraction dim (sublane aligned)

    # ---- layout glue (host side): lane-dense channels-first input ----
    x_cm = jnp.transpose(x_nhwc, (3, 0, 1, 2)).reshape(cin, m)
    x_cm = jnp.pad(x_cm, ((0, _CPAD - cin), (0, 0)))                    # (8, M)

    # ---- layout glue: pre-reshaped im2col weights (no in-kernel weight slicing) ----
    w1r = jnp.pad(w1, ((0, 0), (0, 0), (0, _CPAD - cin), (0, 0))).reshape(k, c).T  # (C, K)
    b1r = b1.reshape(c, 1)
    w2r = jnp.pad(w2.reshape(k, 1).T, ((0, _CPAD - 1), (0, 0)))         # (8, K), row 0 real
    b2r = b2.reshape(1, 1)

    # ---- static per-tap lane shifts and zero-padding validity masks ----
    taps = [(dy, dx) for dy in (-1, 0, 1) for dx in (-1, 0, 1)]
    shifts = tuple(_LPAD + dy * w + dx for dy, dx in taps)
    yy, xx = np.meshgrid(np.arange(h), np.arange(w), indexing="ij")
    masks = jnp.asarray(np.stack([
        np.tile(((yy + dy >= 0) & (yy + dy < h) &
                 (xx + dx >= 0) & (xx + dx < w)).astype(np.float32).reshape(-1), n)
        for dy, dx in taps]))                                           # (9, M)

    kernel = functools.partial(_depth_kernel, shifts=shifts, m_total=m, m_frame=mf)

    # Tiny problem (two 16x16x3 frames): everything fits VMEM in one step, so a
    # single grid step is used (no accumulating output, no dimension_semantics).
    # TODO(synk): for the real (larger) HG model, tile rows with a 1-row halo
    # over a 'parallel' grid axis and size tiles against 64 MiB VMEM for v7x.
    out = pl.pallas_call(
        kernel,
        out_shape=jax.ShapeDtypeStruct((1, mf), jnp.float32),
        grid=(1,),
        in_specs=[
            pl.BlockSpec((_CPAD, m), lambda i: (0, 0)),
            pl.BlockSpec((9, m), lambda i: (0, 0)),
            pl.BlockSpec((c, k), lambda i: (0, 0)),
            pl.BlockSpec((c, 1), lambda i: (0, 0)),
            pl.BlockSpec((_CPAD, k), lambda i: (0, 0)),
            pl.BlockSpec((1, 1), lambda i: (0, 0)),
        ],
        out_specs=pl.BlockSpec((1, mf), lambda i: (0, 0)),
    )(x_cm, masks, w1r, b1r, w2r, b2r)

    return out.reshape(h, w)


def _reference_forward(x_nhwc, w1, b1, w2, b2):
    """Pure-JAX reference of the same stand-in depth net + frame mean."""
    dn = ("NHWC", "HWIO", "NHWC")
    h = lax.conv_general_dilated(x_nhwc, w1, (1, 1), "SAME",
                                 dimension_numbers=dn,
                                 precision=lax.Precision.HIGHEST) + b1
    h = jnp.maximum(h, 0.0)
    d = lax.conv_general_dilated(h, w2, (1, 1), "SAME",
                                 dimension_numbers=dn,
                                 precision=lax.Precision.HIGHEST) + b2
    return jnp.mean(d, axis=0)[..., 0]


if __name__ == "__main__":
    key = jax.random.PRNGKey(0)
    k_x, k_w1, k_b1, k_w2, k_b2 = jax.random.split(key, 5)

    N, H, W, CIN, C = 2, 16, 16, 3, 8
    # `input` of the PyTorch forward (pre-transpose1323): two NHWC frames.
    x = jax.random.normal(k_x, (N, H, W, CIN), dtype=jnp.float32)

    # Deterministic synthetic parameters for the stand-in depth net (HWIO).
    w1 = 0.1 * jax.random.normal(k_w1, (3, 3, CIN, C), dtype=jnp.float32)
    b1 = 0.1 * jax.random.normal(k_b1, (C,), dtype=jnp.float32)
    w2 = 0.1 * jax.random.normal(k_w2, (3, 3, C, 1), dtype=jnp.float32)
    b2 = 0.1 * jax.random.normal(k_b2, (1,), dtype=jnp.float32)

    p = depth_projection_forward(x, w1, b1, w2, b2)
    jax.block_until_ready(p)
    assert p.shape == (H, W) and p.dtype == jnp.float32

    # Correctness check against the pure-JAX reference of the same net.
    ref = _reference_forward(x, w1, b1, w2, b2)
    np.testing.assert_allclose(np.asarray(p), np.asarray(ref), rtol=1e-2, atol=1e-2)

    print("KERNEL_OK")
</pallas_src>

<mosaic_0001>
module attributes {stable_mosaic.version = 11 : i64} {
  func.func @_depth_kernel(%arg0: i32, %arg1: memref<8x512xf32, #tpu.memory_space<vmem>>, %arg2: memref<9x512xf32, #tpu.memory_space<vmem>>, %arg3: memref<8x72xf32, #tpu.memory_space<vmem>>, %arg4: memref<8x1xf32, #tpu.memory_space<vmem>>, %arg5: memref<8x72xf32, #tpu.memory_space<vmem>>, %arg6: memref<1x1xf32, #tpu.memory_space<vmem>>, %arg7: memref<1x256xf32, #tpu.memory_space<vmem>>) attributes {dimension_semantics = [#tpu.dimension_semantics<arbitrary>], iteration_bounds = array<i64: 1>, scalar_prefetch = 0 : i64, scratch_operands = 0 : i64, tpu.core_type = #tpu.core_type<tc>, window_params = [{pipeline_mode = #tpu.pipeline_mode<synchronous>, transform_indices = @transform_0, window_bounds = array<i64: 8, 512>}, {pipeline_mode = #tpu.pipeline_mode<synchronous>, transform_indices = @transform_1, window_bounds = array<i64: 9, 512>}, {pipeline_mode = #tpu.pipeline_mode<synchronous>, transform_indices = @transform_2, window_bounds = array<i64: 8, 72>}, {pipeline_mode = #tpu.pipeline_mode<synchronous>, transform_indices = @transform_3, window_bounds = array<i64: 8, 1>}, {pipeline_mode = #tpu.pipeline_mode<synchronous>, transform_indices = @transform_4, window_bounds = array<i64: 8, 72>}, {pipeline_mode = #tpu.pipeline_mode<synchronous>, transform_indices = @transform_5, window_bounds = array<i64: 1, 1>}, {pipeline_mode = #tpu.pipeline_mode<synchronous>, transform_indices = @transform_6, window_bounds = array<i64: 1, 256>}]} {
    %cst = arith.constant 0.000000e+00 : f32
    %0 = vector.broadcast %cst : f32 to vector<8x128xf32>
    %c0 = arith.constant 0 : index
    %c0_0 = arith.constant 0 : index
    %1 = vector.load %arg2[%c0, %c0_0] : memref<9x512xf32, #tpu.memory_space<vmem>>, vector<9x512xf32>
    %c0_1 = arith.constant 0 : index
    %c0_2 = arith.constant 0 : index
    %2 = vector.load %arg3[%c0_1, %c0_2] : memref<8x72xf32, #tpu.memory_space<vmem>>, vector<8x72xf32>
    %c0_3 = arith.constant 0 : index
    %c0_4 = arith.constant 0 : index
    %3 = vector.load %arg1[%c0_3, %c0_4] : memref<8x512xf32, #tpu.memory_space<vmem>>, vector<8x512xf32>
    %4 = tpu.concatenate %0, %3, %0 in 1 : vector<8x128xf32>, vector<8x512xf32>, vector<8x128xf32> -> vector<8x768xf32>
    %5 = vector.extract_strided_slice %4 {offsets = [0, 111], sizes = [8, 512], strides = [1, 1]} : vector<8x768xf32> to vector<8x512xf32>
    %6 = vector.extract_strided_slice %1 {offsets = [0, 0], sizes = [1, 512], strides = [1, 1]} : vector<9x512xf32> to vector<1x512xf32>
    %7 = vector.broadcast %6 : vector<1x512xf32> to vector<8x512xf32>
    %8 = arith.mulf %5, %7 : vector<8x512xf32>
    %9 = vector.extract_strided_slice %4 {offsets = [0, 112], sizes = [8, 512], strides = [1, 1]} : vector<8x768xf32> to vector<8x512xf32>
    %10 = vector.extract_strided_slice %1 {offsets = [1, 0], sizes = [1, 512], strides = [1, 1]} : vector<9x512xf32> to vector<1x512xf32>
    %11 = vector.broadcast %10 : vector<1x512xf32> to vector<8x512xf32>
    %12 = arith.mulf %9, %11 : vector<8x512xf32>
    %13 = vector.extract_strided_slice %4 {offsets = [0, 113], sizes = [8, 512], strides = [1, 1]} : vector<8x768xf32> to vector<8x512xf32>
    %14 = vector.extract_strided_slice %1 {offsets = [2, 0], sizes = [1, 512], strides = [1, 1]} : vector<9x512xf32> to vector<1x512xf32>
    %15 = vector.broadcast %14 : vector<1x512xf32> to vector<8x512xf32>
    %16 = arith.mulf %13, %15 : vector<8x512xf32>
    %17 = vector.extract_strided_slice %4 {offsets = [0, 127], sizes = [8, 512], strides = [1, 1]} : vector<8x768xf32> to vector<8x512xf32>
    %18 = vector.extract_strided_slice %1 {offsets = [3, 0], sizes = [1, 512], strides = [1, 1]} : vector<9x512xf32> to vector<1x512xf32>
    %19 = vector.broadcast %18 : vector<1x512xf32> to vector<8x512xf32>
    %20 = arith.mulf %17, %19 : vector<8x512xf32>
    %21 = vector.extract_strided_slice %4 {offsets = [0, 128], sizes = [8, 512], strides = [1, 1]} : vector<8x768xf32> to vector<8x512xf32>
    %22 = vector.extract_strided_slice %1 {offsets = [4, 0], sizes = [1, 512], strides = [1, 1]} : vector<9x512xf32> to vector<1x512xf32>
    %23 = vector.broadcast %22 : vector<1x512xf32> to vector<8x512xf32>
    %24 = arith.mulf %21, %23 : vector<8x512xf32>
    %25 = vector.extract_strided_slice %4 {offsets = [0, 129], sizes = [8, 512], strides = [1, 1]} : vector<8x768xf32> to vector<8x512xf32>
    %26 = vector.extract_strided_slice %1 {offsets = [5, 0], sizes = [1, 512], strides = [1, 1]} : vector<9x512xf32> to vector<1x512xf32>
    %27 = vector.broadcast %26 : vector<1x512xf32> to vector<8x512xf32>
    %28 = arith.mulf %25, %27 : vector<8x512xf32>
    %29 = vector.extract_strided_slice %4 {offsets = [0, 143], sizes = [8, 512], strides = [1, 1]} : vector<8x768xf32> to vector<8x512xf32>
    %30 = vector.extract_strided_slice %1 {offsets = [6, 0], sizes = [1, 512], strides = [1, 1]} : vector<9x512xf32> to vector<1x512xf32>
    %31 = vector.broadcast %30 : vector<1x512xf32> to vector<8x512xf32>
    %32 = arith.mulf %29, %31 : vector<8x512xf32>
    %33 = vector.extract_strided_slice %4 {offsets = [0, 144], sizes = [8, 512], strides = [1, 1]} : vector<8x768xf32> to vector<8x512xf32>
    %34 = vector.extract_strided_slice %1 {offsets = [7, 0], sizes = [1, 512], strides = [1, 1]} : vector<9x512xf32> to vector<1x512xf32>
    %35 = vector.broadcast %34 : vector<1x512xf32> to vector<8x512xf32>
    %36 = arith.mulf %33, %35 : vector<8x512xf32>
    %37 = vector.extract_strided_slice %4 {offsets = [0, 145], sizes = [8, 512], strides = [1, 1]} : vector<8x768xf32> to vector<8x512xf32>
    %38 = vector.extract_strided_slice %1 {offsets = [8, 0], sizes = [1, 512], strides = [1, 1]} : vector<9x512xf32> to vector<1x512xf32>
    %39 = vector.broadcast %38 : vector<1x512xf32> to vector<8x512xf32>
    %40 = arith.mulf %37, %39 : vector<8x512xf32>
    %41 = tpu.concatenate %8, %12, %16, %20, %24, %28, %32, %36, %40 in 0 : vector<8x512xf32>, vector<8x512xf32>, vector<8x512xf32>, vector<8x512xf32>, vector<8x512xf32>, vector<8x512xf32>, vector<8x512xf32>, vector<8x512xf32>, vector<8x512xf32> -> vector<72x512xf32>
    %cst_5 = arith.constant dense<0.000000e+00> : vector<8x512xf32>
    %42 = tpu.matmul %2, %41, %cst_5 {dimension_numbers = #tpu.dot_dimension_numbers<[1], [0], [0], [1], [0, 0, 1, 1], [], []>} : vector<8x72xf32>, vector<72x512xf32>, vector<8x512xf32> -> vector<8x512xf32>
    %c0_6 = arith.constant 0 : index
    %c0_7 = arith.constant 0 : index
    %43 = vector.load %arg4[%c0_6, %c0_7] : memref<8x1xf32, #tpu.memory_space<vmem>>, vector<8x1xf32>
    %44 = vector.broadcast %43 : vector<8x1xf32> to vector<8x512xf32>
    %45 = arith.addf %42, %44 : vector<8x512xf32>
    %cst_8 = arith.constant 0.000000e+00 : f32
    %46 = vector.broadcast %cst_8 : f32 to vector<8x512xf32>
    %47 = arith.maximumf %45, %46 : vector<8x512xf32>
    %c0_9 = arith.constant 0 : index
    %c0_10 = arith.constant 0 : index
    %48 = vector.load %arg5[%c0_9, %c0_10] : memref<8x72xf32, #tpu.memory_space<vmem>>, vector<8x72xf32>
    %49 = tpu.concatenate %0, %47, %0 in 1 : vector<8x128xf32>, vector<8x512xf32>, vector<8x128xf32> -> vector<8x768xf32>
    %50 = vector.extract_strided_slice %49 {offsets = [0, 111], sizes = [8, 512], strides = [1, 1]} : vector<8x768xf32> to vector<8x512xf32>
    %51 = vector.extract_strided_slice %1 {offsets = [0, 0], sizes = [1, 512], strides = [1, 1]} : vector<9x512xf32> to vector<1x512xf32>
    %52 = vector.broadcast %51 : vector<1x512xf32> to vector<8x512xf32>
    %53 = arith.mulf %50, %52 : vector<8x512xf32>
    %54 = vector.extract_strided_slice %49 {offsets = [0, 112], sizes = [8, 512], strides = [1, 1]} : vector<8x768xf32> to vector<8x512xf32>
    %55 = vector.extract_strided_slice %1 {offsets = [1, 0], sizes = [1, 512], strides = [1, 1]} : vector<9x512xf32> to vector<1x512xf32>
    %56 = vector.broadcast %55 : vector<1x512xf32> to vector<8x512xf32>
    %57 = arith.mulf %54, %56 : vector<8x512xf32>
    %58 = vector.extract_strided_slice %49 {offsets = [0, 113], sizes = [8, 512], strides = [1, 1]} : vector<8x768xf32> to vector<8x512xf32>
    %59 = vector.extract_strided_slice %1 {offsets = [2, 0], sizes = [1, 512], strides = [1, 1]} : vector<9x512xf32> to vector<1x512xf32>
    %60 = vector.broadcast %59 : vector<1x512xf32> to vector<8x512xf32>
    %61 = arith.mulf %58, %60 : vector<8x512xf32>
    %62 = vector.extract_strided_slice %49 {offsets = [0, 127], sizes = [8, 512], strides = [1, 1]} : vector<8x768xf32> to vector<8x512xf32>
    %63 = vector.extract_strided_slice %1 {offsets = [3, 0], sizes = [1, 512], strides = [1, 1]} : vector<9x512xf32> to vector<1x512xf32>
    %64 = vector.broadcast %63 : vector<1x512xf32> to vector<8x512xf32>
    %65 = arith.mulf %62, %64 : vector<8x512xf32>
    %66 = vector.extract_strided_slice %49 {offsets = [0, 128], sizes = [8, 512], strides = [1, 1]} : vector<8x768xf32> to vector<8x512xf32>
    %67 = vector.extract_strided_slice %1 {offsets = [4, 0], sizes = [1, 512], strides = [1, 1]} : vector<9x512xf32> to vector<1x512xf32>
    %68 = vector.broadcast %67 : vector<1x512xf32> to vector<8x512xf32>
    %69 = arith.mulf %66, %68 : vector<8x512xf32>
    %70 = vector.extract_strided_slice %49 {offsets = [0, 129], sizes = [8, 512], strides = [1, 1]} : vector<8x768xf32> to vector<8x512xf32>
    %71 = vector.extract_strided_slice %1 {offsets = [5, 0], sizes = [1, 512], strides = [1, 1]} : vector<9x512xf32> to vector<1x512xf32>
    %72 = vector.broadcast %71 : vector<1x512xf32> to vector<8x512xf32>
    %73 = arith.mulf %70, %72 : vector<8x512xf32>
    %74 = vector.extract_strided_slice %49 {offsets = [0, 143], sizes = [8, 512], strides = [1, 1]} : vector<8x768xf32> to vector<8x512xf32>
    %75 = vector.extract_strided_slice %1 {offsets = [6, 0], sizes = [1, 512], strides = [1, 1]} : vector<9x512xf32> to vector<1x512xf32>
    %76 = vector.broadcast %75 : vector<1x512xf32> to vector<8x512xf32>
    %77 = arith.mulf %74, %76 : vector<8x512xf32>
    %78 = vector.extract_strided_slice %49 {offsets = [0, 144], sizes = [8, 512], strides = [1, 1]} : vector<8x768xf32> to vector<8x512xf32>
    %79 = vector.extract_strided_slice %1 {offsets = [7, 0], sizes = [1, 512], strides = [1, 1]} : vector<9x512xf32> to vector<1x512xf32>
    %80 = vector.broadcast %79 : vector<1x512xf32> to vector<8x512xf32>
    %81 = arith.mulf %78, %80 : vector<8x512xf32>
    %82 = vector.extract_strided_slice %49 {offsets = [0, 145], sizes = [8, 512], strides = [1, 1]} : vector<8x768xf32> to vector<8x512xf32>
    %83 = vector.extract_strided_slice %1 {offsets = [8, 0], sizes = [1, 512], strides = [1, 1]} : vector<9x512xf32> to vector<1x512xf32>
    %84 = vector.broadcast %83 : vector<1x512xf32> to vector<8x512xf32>
    %85 = arith.mulf %82, %84 : vector<8x512xf32>
    %86 = tpu.concatenate %53, %57, %61, %65, %69, %73, %77, %81, %85 in 0 : vector<8x512xf32>, vector<8x512xf32>, vector<8x512xf32>, vector<8x512xf32>, vector<8x512xf32>, vector<8x512xf32>, vector<8x512xf32>, vector<8x512xf32>, vector<8x512xf32> -> vector<72x512xf32>
    %cst_11 = arith.constant dense<0.000000e+00> : vector<8x512xf32>
    %87 = tpu.matmul %48, %86, %cst_11 {dimension_numbers = #tpu.dot_dimension_numbers<[1], [0], [0], [1], [0, 0, 1, 1], [], []>} : vector<8x72xf32>, vector<72x512xf32>, vector<8x512xf32> -> vector<8x512xf32>
    %88 = vector.extract_strided_slice %87 {offsets = [0, 0], sizes = [1, 256], strides = [1, 1]} : vector<8x512xf32> to vector<1x256xf32>
    %89 = vector.extract_strided_slice %87 {offsets = [0, 256], sizes = [1, 256], strides = [1, 1]} : vector<8x512xf32> to vector<1x256xf32>
    %90 = arith.addf %88, %89 : vector<1x256xf32>
    %cst_12 = arith.constant 5.000000e-01 : f32
    %91 = vector.broadcast %cst_12 : f32 to vector<1x256xf32>
    %92 = arith.mulf %91, %90 : vector<1x256xf32>
    %c0_13 = arith.constant 0 : index
    %c0_14 = arith.constant 0 : index
    %93 = vector.load %arg6[%c0_13, %c0_14] : memref<1x1xf32, #tpu.memory_space<vmem>>, vector<1x1xf32>
    %94 = vector.broadcast %93 : vector<1x1xf32> to vector<1x256xf32>
    %95 = arith.addf %92, %94 : vector<1x256xf32>
    %c0_15 = arith.constant 0 : index
    %c0_16 = arith.constant 0 : index
    %96 = vector.load %arg7[%c0_15, %c0_16] : memref<1x256xf32, #tpu.memory_space<vmem>>, vector<1x256xf32>
    tpu.vector_store %arg7[%c0_15, %c0_16], %95 {strides = array<i32>} : memref<1x256xf32, #tpu.memory_space<vmem>>, vector<1x256xf32>,
    return
  }
  func.func @transform_0(%arg0: i32) -> (i32, i32) {
    %c0_i32 = arith.constant 0 : i32
    %c0_i32_0 = arith.constant 0 : i32
    %c0_i32_1 = arith.constant 0 : i32
    return %c0_i32, %c0_i32_0 : i32, i32
  }
  func.func @transform_1(%arg0: i32) -> (i32, i32) {
    %c0_i32 = arith.constant 0 : i32
    %c0_i32_0 = arith.constant 0 : i32
    %c0_i32_1 = arith.constant 0 : i32
    return %c0_i32, %c0_i32_0 : i32, i32
  }
  func.func @transform_2(%arg0: i32) -> (i32, i32) {
    %c0_i32 = arith.constant 0 : i32
    %c0_i32_0 = arith.constant 0 : i32
    %c0_i32_1 = arith.constant 0 : i32
    return %c0_i32, %c0_i32_0 : i32, i32
  }
  func.func @transform_3(%arg0: i32) -> (i32, i32) {
    %c0_i32 = arith.constant 0 : i32
    %c0_i32_0 = arith.constant 0 : i32
    %c0_i32_1 = arith.constant 0 : i32
    return %c0_i32, %c0_i32_0 : i32, i32
  }
  func.func @transform_4(%arg0: i32) -> (i32, i32) {
    %c0_i32 = arith.constant 0 : i32
    %c0_i32_0 = arith.constant 0 : i32
    %c0_i32_1 = arith.constant 0 : i32
    return %c0_i32, %c0_i32_0 : i32, i32
  }
  func.func @transform_5(%arg0: i32) -> (i32, i32) {
    %c0_i32 = arith.constant 0 : i32
    %c0_i32_0 = arith.constant 0 : i32
    %c0_i32_1 = arith.constant 0 : i32
    return %c0_i32, %c0_i32_0 : i32, i32
  }
  func.func @transform_6(%arg0: i32) -> (i32, i32) {
    %c0_i32 = arith.constant 0 : i32
    %c0_i32_0 = arith.constant 0 : i32
    %c0_i32_1 = arith.constant 0 : i32
    return %c0_i32, %c0_i32_0 : i32, i32
  }
}

</mosaic_0001>

<llo_original>
// kernel: tpu_custom_call.1
$region0: #{tpu_custom_call.1}
  #allocation0 [shape = 'u32[]', space=smem, size = 0x4, offset = 0x4, fixed_abs, tag = 'smem constant byte address 0x4 - core index']
  #allocation1 [shape = 'u32[72,128]{1,0:T(1,128)}', space=vmem, size = 0x9000, scoped, tag = 'internal scratch']
  #allocation2 [shape = 'f32[1,1]{1,0:T(1,128)S(1)}', space=vmem, size = 0x200, scoped, tag = 'scoped memory for tpu_custom_call.1']
  %s0 = inlined_call_operand.hbm [shape: f32[8,512], index: 0, kind: input, shape index: {}]
  %s1 = inlined_call_operand.hbm [shape: f32[9,512], index: 1, kind: input, shape index: {}]
  %s2 = inlined_call_operand.vmem [shape: f32[8,72], index: 2, kind: input, shape index: {}]
  %s3 = inlined_call_operand.vmem [shape: f32[8,1], index: 3, kind: input, shape index: {}]
  %s4 = inlined_call_operand.hbm [shape: f32[8,72], index: 4, kind: input, shape index: {}]
  %s5 = inlined_call_operand.<no memory space> [shape: f32[1,1], index: 5, kind: input, shape index: {}]
  %s6 = inlined_call_operand.hbm [shape: f32[1,256], index: 6, kind: output, shape index: {}]
  %s7 = sld [smem:[#allocation0]]
  $region46: #{tpu_custom_call.1} parent=0
    _
  %s9 = ssub.s32 1, %s7
  %s10 = scalar_select 0, %s9, %s7
  %v11 = vstv %s5
  %12 = vst [vmem:[#allocation2] sm:$0x1] %v11
  $region1: #{tpu_custom_call.1} parent=0
    #allocation3 [shape = 'u8[16384]{0}', space=vmem, size = 0x4000, scoped, tag = 'input window, operand 0, single buffered']
    #allocation4 [shape = 's32[1]{0}', space=sflag, size = 0x4, scoped, tag = 'scoped memory for tpu_custom_call.1']
    #allocation5 [shape = 's32[1]{0}', space=sflag, size = 0x4, scoped, tag = 'scoped memory for tpu_custom_call.1']
    #allocation6 [shape = 'u8[32768]{0}', space=vmem, size = 0x8000, scoped, tag = 'input window, operand 1, single buffered']
    #allocation7 [shape = 's32[1]{0}', space=sflag, size = 0x4, scoped, tag = 'scoped memory for tpu_custom_call.1']
    #allocation8 [shape = 'u8[4096]{0}', space=vmem, size = 0x1000, scoped, tag = 'input window, operand 4, single buffered']
    #allocation9 [shape = 'u8[1024]{0}', space=vmem, size = 0x400, scoped, tag = 'output window, operand 0, single buffered']
    %13 = vsyncpa [#allocation4], 0
    %14 = vsyncpa [#allocation7], 0
    %15 = vsyncpa [#allocation5], 0
    // Predicated region
    $region2: #{tpu_custom_call.1} parent=1 // pred_check
      _
    $region3: #{tpu_custom_call.1} parent=1 // pred_check_branch
      %17 = sbr.rel (0) target = $region5
    $region4: #{tpu_custom_call.1} parent=1 // pred_region
      %19 = vsyncadd [#allocation4], 0
      %s21 = sshll.u32 %s0, 4
      %s22 = int_to_ptr.hbm [resolvable:$true] %s21
      %s23 = sshll.u32 [#allocation3], 4
      %s24 = int_to_ptr.vmem [resolvable:$true] %s23
      %26 = dma.hbm_to_vmem [thread:$0]  %s22, 512, %s24, [#allocation4]
    $region5: #{tpu_custom_call.1} parent=1 // pred_fallthru
      _
    // Predicated region
    $region6: #{tpu_custom_call.1} parent=1 // pred_check
      _
    $region7: #{tpu_custom_call.1} parent=1 // pred_check_branch
      %28 = sbr.rel (0) target = $region9
    $region8: #{tpu_custom_call.1} parent=1 // pred_region
      %30 = vsyncadd [#allocation7], 0
      %s31 = sshll.u32 %s1, 4
      %s32 = int_to_ptr.hbm [resolvable:$true] %s31
      %s33 = sshll.u32 [#allocation6], 4
      %s34 = int_to_ptr.vmem [resolvable:$true] %s33
      %39 = dma.hbm_to_vmem [thread:$0]  %s32, 1024, %s34, [#allocation7], 512, 512, 32
    $region9: #{tpu_custom_call.1} parent=1 // pred_fallthru
      _
    // Predicated region
    $region10: #{tpu_custom_call.1} parent=1 // pred_check
      _
    $region11: #{tpu_custom_call.1} parent=1 // pred_check_branch
      %41 = sbr.rel (0) target = $region13
    $region12: #{tpu_custom_call.1} parent=1 // pred_region
      _
    $region13: #{tpu_custom_call.1} parent=1 // pred_fallthru
      _
    // Predicated region
    $region14: #{tpu_custom_call.1} parent=1 // pred_check
      _
    $region15: #{tpu_custom_call.1} parent=1 // pred_check_branch
      %43 = sbr.rel (0) target = $region17
    $region16: #{tpu_custom_call.1} parent=1 // pred_region
      _
    $region17: #{tpu_custom_call.1} parent=1 // pred_fallthru
      _
    // Predicated region
    $region18: #{tpu_custom_call.1} parent=1 // pred_check
      _
    $region19: #{tpu_custom_call.1} parent=1 // pred_check_branch
      %45 = sbr.rel (0) target = $region21
    $region20: #{tpu_custom_call.1} parent=1 // pred_region
      %47 = vsyncadd [#allocation7], 0
      %s49 = sshll.u32 %s4, 4
      %s50 = int_to_ptr.hbm [resolvable:$true] %s49
      %s51 = sshll.u32 [#allocation8], 4
      %s52 = int_to_ptr.vmem [resolvable:$true] %s51
      %54 = dma.hbm_to_vmem [thread:$0]  %s50, 128, %s52, [#allocation7]
    $region21: #{tpu_custom_call.1} parent=1 // pred_fallthru
      _
    // Predicated region
    $region22: #{tpu_custom_call.1} parent=1 // pred_check
      _
    $region23: #{tpu_custom_call.1} parent=1 // pred_check_branch
      %56 = sbr.rel (0) target = $region25
    $region24: #{tpu_custom_call.1} parent=1 // pred_region
      _
    $region25: #{tpu_custom_call.1} parent=1 // pred_fallthru
      _
    // Predicated region
    $region26: #{tpu_custom_call.1} parent=1 // pred_check
      _
    $region27: #{tpu_custom_call.1} parent=1 // pred_check_branch
      %58 = sbr.rel (0) target = $region29
    $region28: #{tpu_custom_call.1} parent=1 // pred_region
      %60 = dma.done [#allocation4], 512
    $region29: #{tpu_custom_call.1} parent=1 // pred_fallthru
      _
    // Predicated region
    $region30: #{tpu_custom_call.1} parent=1 // pred_check
      _
    $region31: #{tpu_custom_call.1} parent=1 // pred_check_branch
      %62 = sbr.rel (0) target = $region33
    $region32: #{tpu_custom_call.1} parent=1 // pred_region
      %64 = dma.done [#allocation7], 1024
    $region33: #{tpu_custom_call.1} parent=1 // pred_fallthru
      _
    // Predicated region
    $region34: #{tpu_custom_call.1} parent=1 // pred_check
      _
    $region35: #{tpu_custom_call.1} parent=1 // pred_check_branch
      %66 = sbr.rel (0) target = $region37
    $region36: #{tpu_custom_call.1} parent=1 // pred_region
      %68 = dma.done [#allocation7], 128
    $region37: #{tpu_custom_call.1} parent=1 // pred_fallthru
      _
    %v69 = vld [vmem:[#allocation6] sm:$0xff]
    %v70 = vld [vmem:[#allocation6 + $0x8] sm:$0xff]
    %v71 = vld [vmem:[#allocation6 + $0x10] sm:$0xff]
    %v72 = vld [vmem:[#allocation6 + $0x18] sm:$0xff]
    %v73 = vld [vmem:[#allocation6 + $0x20] sm:$0x1]
    %v74 = vld [vmem:[#allocation6 + $0x28] sm:$0x1]
    %v75 = vld [vmem:[#allocation6 + $0x30] sm:$0x1]
    %v76 = vld [vmem:[#allocation6 + $0x38] sm:$0x1]
    %v77 = vld [vmem:[%s2] sm:$0xff]
    %v78 = vld [vmem:[#allocation3] sm:$0xff]
    %v79 = vld [vmem:[#allocation3 + $0x8] sm:$0xff]
    %v80 = vld [vmem:[#allocation3 + $0x10] sm:$0xff]
    %v81 = vld [vmem:[#allocation3 + $0x18] sm:$0xff]
    %v82 = vperm.slane %v69, 0
    %v83 = vperm.slane %v70, 0
    %v84 = vperm.slane %v71, 0
    %v85 = vperm.slane %v72, 0
    %90 = vrot.lane.b32.xlu0 %v82, 111
    %v91 = vpop.permute.xlu0 %90
    %92 = vrot.lane.b32.xlu0 %v83, 111
    %v93 = vpop.permute.xlu0 %92
    %94 = vrot.lane.b32.xlu0 %v84, 111
    %v95 = vpop.permute.xlu0 %94
    %96 = vrot.lane.b32.xlu0 %v85, 111
    %v97 = vpop.permute.xlu0 %96
    %vm98 = vcmask 908288
    %v99 = vsel %vm98, %v91, %v93
    %v100 = vsel %vm98, %v93, %v95
    %v101 = vsel %vm98, %v95, %v97
    %v107 = vmul.f32 %v91, 0.0
    %v108 = vmul.f32 %v78, %v99
    %v109 = vmul.f32 %v79, %v100
    %v110 = vmul.f32 %v80, %v101
    %v111 = vmul.f32 %v81, %v97
    %v112 = vperm.slane %v69, 1
    %v113 = vperm.slane %v70, 1
    %v114 = vperm.slane %v71, 1
    %v115 = vperm.slane %v72, 1
    %120 = vrot.lane.b32.xlu0 %v112, 112
    %v121 = vpop.permute.xlu0 %120
    %122 = vrot.lane.b32.xlu0 %v113, 112
    %v123 = vpop.permute.xlu0 %122
    %124 = vrot.lane.b32.xlu0 %v114, 112
    %v125 = vpop.permute.xlu0 %124
    %126 = vrot.lane.b32.xlu0 %v115, 112
    %v127 = vpop.permute.xlu0 %126
    %vm128 = vcmask 916480
    %v129 = vsel %vm128, %v121, %v123
    %v130 = vsel %vm128, %v123, %v125
    %v131 = vsel %vm128, %v125, %v127
    %v137 = vmul.f32 %v121, 0.0
    %v138 = vmul.f32 %v78, %v129
    %v139 = vmul.f32 %v79, %v130
    %v140 = vmul.f32 %v80, %v131
    %v141 = vmul.f32 %v81, %v127
    %v142 = vperm.slane %v69, 2
    %v143 = vperm.slane %v70, 2
    %v144 = vperm.slane %v71, 2
    %v145 = vperm.slane %v72, 2
    %150 = vrot.lane.b32.xlu0 %v142, 113
    %v151 = vpop.permute.xlu0 %150
    %152 = vrot.lane.b32.xlu0 %v143, 113
    %v153 = vpop.permute.xlu0 %152
    %154 = vrot.lane.b32.xlu0 %v144, 113
    %v155 = vpop.permute.xlu0 %154
    %156 = vrot.lane.b32.xlu0 %v145, 113
    %v157 = vpop.permute.xlu0 %156
    %vm158 = vcmask 924672
    %v159 = vsel %vm158, %v151, %v153
    %v160 = vsel %vm158, %v153, %v155
    %v161 = vsel %vm158, %v155, %v157
    %v167 = vmul.f32 %v151, 0.0
    %v168 = vmul.f32 %v78, %v159
    %v169 = vmul.f32 %v79, %v160
    %v170 = vmul.f32 %v80, %v161
    %v171 = vmul.f32 %v81, %v157
    %v172 = vperm.slane %v69, 3
    %v173 = vperm.slane %v70, 3
    %v174 = vperm.slane %v71, 3
    %v175 = vperm.slane %v72, 3
    %180 = vrot.lane.b32.xlu0 %v172, 127
    %v181 = vpop.permute.xlu0 %180
    %182 = vrot.lane.b32.xlu0 %v173, 127
    %v183 = vpop.permute.xlu0 %182
    %184 = vrot.lane.b32.xlu0 %v174, 127
    %v185 = vpop.permute.xlu0 %184
    %186 = vrot.lane.b32.xlu0 %v175, 127
    %v187 = vpop.permute.xlu0 %186
    %vm188 = vcmask 1039360
    %v189 = vsel %vm188, %v181, %v183
    %v190 = vsel %vm188, %v183, %v185
    %v191 = vsel %vm188, %v185, %v187
    %v197 = vmul.f32 %v181, 0.0
    %v198 = vmul.f32 %v78, %v189
    %v199 = vmul.f32 %v79, %v190
    %v200 = vmul.f32 %v80, %v191
    %v201 = vmul.f32 %v81, %v187
    %v202 = vperm.slane %v69, 4
    %v203 = vperm.slane %v70, 4
    %v204 = vperm.slane %v71, 4
    %v205 = vperm.slane %v72, 4
    %v206 = vmul.f32 %v78, %v202
    %v207 = vmul.f32 %v79, %v203
    %v208 = vmul.f32 %v80, %v204
    %v209 = vmul.f32 %v81, %v205
    %v210 = vperm.slane %v69, 5
    %v211 = vperm.slane %v70, 5
    %v212 = vperm.slane %v71, 5
    %v213 = vperm.slane %v72, 5
    %218 = vrot.lane.b32.xlu0 %v210, 1
    %v219 = vpop.permute.xlu0 %218
    %220 = vrot.lane.b32.xlu0 %v211, 1
    %v221 = vpop.permute.xlu0 %220
    %222 = vrot.lane.b32.xlu0 %v212, 1
    %v223 = vpop.permute.xlu0 %222
    %224 = vrot.lane.b32.xlu0 %v213, 1
    %v225 = vpop.permute.xlu0 %224
    %vm226 = vcmask 7168
    %v227 = vsel %vm226, %v219, %v221
    %v228 = vsel %vm226, %v221, %v223
    %v229 = vsel %vm226, %v223, %v225
    %v235 = vmul.f32 %v78, %v219
    %v236 = vmul.f32 %v79, %v227
    %v237 = vmul.f32 %v80, %v228
    %v238 = vmul.f32 %v81, %v229
    %v239 = vmul.f32 %v225, 0.0
    %v240 = vperm.slane %v69, 6
    %v241 = vperm.slane %v70, 6
    %v242 = vperm.slane %v71, 6
    %v243 = vperm.slane %v72, 6
    %248 = vrot.lane.b32.xlu0 %v240, 15
    %v249 = vpop.permute.xlu0 %248
    %250 = vrot.lane.b32.xlu0 %v241, 15
    %v251 = vpop.permute.xlu0 %250
    %252 = vrot.lane.b32.xlu0 %v242, 15
    %v253 = vpop.permute.xlu0 %252
    %254 = vrot.lane.b32.xlu0 %v243, 15
    %v255 = vpop.permute.xlu0 %254
    %vm256 = vcmask 121856
    %v257 = vsel %vm256, %v249, %v251
    %v258 = vsel %vm256, %v251, %v253
    %v259 = vsel %vm256, %v253, %v255
    %v265 = vmul.f32 %v78, %v249
    %v266 = vmul.f32 %v79, %v257
    %v267 = vmul.f32 %v80, %v258
    %v268 = vmul.f32 %v81, %v259
    %v269 = vmul.f32 %v255, 0.0
    %v270 = vperm.slane %v69, 7
    %v271 = vperm.slane %v70, 7
    %v272 = vperm.slane %v71, 7
    %v273 = vperm.slane %v72, 7
    %278 = vrot.lane.b32.xlu0 %v270, 16
    %v279 = vpop.permute.xlu0 %278
    %280 = vrot.lane.b32.xlu0 %v271, 16
    %v281 = vpop.permute.xlu0 %280
    %282 = vrot.lane.b32.xlu0 %v272, 16
    %v283 = vpop.permute.xlu0 %282
    %284 = vrot.lane.b32.xlu0 %v273, 16
    %v285 = vpop.permute.xlu0 %284
    %vm286 = vcmask 130048
    %v287 = vsel %vm286, %v279, %v281
    %v288 = vsel %vm286, %v281, %v283
    %v289 = vsel %vm286, %v283, %v285
    %v295 = vmul.f32 %v78, %v279
    %v296 = vmul.f32 %v79, %v287
    %v297 = vmul.f32 %v80, %v288
    %v298 = vmul.f32 %v81, %v289
    %v299 = vmul.f32 %v285, 0.0
    %v300 = vperm.slane %v73, 0
    %v301 = vperm.slane %v74, 0
    %v302 = vperm.slane %v75, 0
    %v303 = vperm.slane %v76, 0
    %308 = vrot.lane.b32.xlu0 %v300, 17
    %v309 = vpop.permute.xlu0 %308
    %310 = vrot.lane.b32.xlu0 %v301, 17
    %v311 = vpop.permute.xlu0 %310
    %312 = vrot.lane.b32.xlu0 %v302, 17
    %v313 = vpop.permute.xlu0 %312
    %314 = vrot.lane.b32.xlu0 %v303, 17
    %v315 = vpop.permute.xlu0 %314
    %vm316 = vcmask 138240
    %v317 = vsel %vm316, %v309, %v311
    %v318 = vsel %vm316, %v311, %v313
    %v319 = vsel %vm316, %v313, %v315
    %v325 = vmul.f32 %v78, %v309
    %v326 = vmul.f32 %v79, %v317
    %v327 = vmul.f32 %v80, %v318
    %v328 = vmul.f32 %v81, %v319
    %v329 = vmul.f32 %v315, 0.0
    %335 = vrot.lane.b32.xlu0 %v137, 127
    %v336 = vpop.permute.xlu0 %335
    %337 = vrot.lane.b32.xlu0 %v138, 127
    %v338 = vpop.permute.xlu0 %337
    %339 = vrot.lane.b32.xlu0 %v139, 127
    %v340 = vpop.permute.xlu0 %339
    %341 = vrot.lane.b32.xlu0 %v140, 127
    %v342 = vpop.permute.xlu0 %341
    %343 = vrot.lane.b32.xlu0 %v141, 127
    %v344 = vpop.permute.xlu0 %343
    %v345 = vsel %vm188, %v336, %v338
    %v346 = vsel %vm188, %v338, %v340
    %v347 = vsel %vm188, %v340, %v342
    %v348 = vsel %vm188, %v342, %v344
    %354 = vrot.lane.b32.xlu0 %v167, 126
    %v355 = vpop.permute.xlu0 %354
    %356 = vrot.lane.b32.xlu0 %v168, 126
    %v357 = vpop.permute.xlu0 %356
    %358 = vrot.lane.b32.xlu0 %v169, 126
    %v359 = vpop.permute.xlu0 %358
    %360 = vrot.lane.b32.xlu0 %v170, 126
    %v361 = vpop.permute.xlu0 %360
    %362 = vrot.lane.b32.xlu0 %v171, 126
    %v363 = vpop.permute.xlu0 %362
    %vm364 = vcmask 1031168
    %v365 = vsel %vm364, %v355, %v357
    %v366 = vsel %vm364, %v357, %v359
    %v367 = vsel %vm364, %v359, %v361
    %v368 = vsel %vm364, %v361, %v363
    %374 = vrot.lane.b32.xlu0 %v197, 112
    %v375 = vpop.permute.xlu0 %374
    %376 = vrot.lane.b32.xlu0 %v198, 112
    %v377 = vpop.permute.xlu0 %376
    %378 = vrot.lane.b32.xlu0 %v199, 112
    %v379 = vpop.permute.xlu0 %378
    %380 = vrot.lane.b32.xlu0 %v200, 112
    %v381 = vpop.permute.xlu0 %380
    %382 = vrot.lane.b32.xlu0 %v201, 112
    %v383 = vpop.permute.xlu0 %382
    %v384 = vsel %vm128, %v375, %v377
    %v385 = vsel %vm128, %v377, %v379
    %v386 = vsel %vm128, %v379, %v381
    %v387 = vsel %vm128, %v381, %v383
    %392 = vrot.lane.b32.xlu0 %v206, 111
    %v393 = vpop.permute.xlu0 %392
    %394 = vrot.lane.b32.xlu0 %v207, 111
    %v395 = vpop.permute.xlu0 %394
    %396 = vrot.lane.b32.xlu0 %v208, 111
    %v397 = vpop.permute.xlu0 %396
    %398 = vrot.lane.b32.xlu0 %v209, 111
    %v399 = vpop.permute.xlu0 %398
    %v400 = vsel %vm98, %v393, %v395
    %v401 = vsel %vm98, %v395, %v397
    %v402 = vsel %vm98, %v397, %v399
    %408 = vrot.lane.b32.xlu0 %v235, 110
    %v409 = vpop.permute.xlu0 %408
    %410 = vrot.lane.b32.xlu0 %v236, 110
    %v411 = vpop.permute.xlu0 %410
    %412 = vrot.lane.b32.xlu0 %v237, 110
    %v413 = vpop.permute.xlu0 %412
    %414 = vrot.lane.b32.xlu0 %v238, 110
    %v415 = vpop.permute.xlu0 %414
    %416 = vrot.lane.b32.xlu0 %v239, 110
    %v417 = vpop.permute.xlu0 %416
    %vm418 = vcmask 900096
    %v419 = vsel %vm418, %v409, %v411
    %v420 = vsel %vm418, %v411, %v413
    %v421 = vsel %vm418, %v413, %v415
    %v422 = vsel %vm418, %v415, %v417
    %428 = vrot.lane.b32.xlu0 %v265, 96
    %v429 = vpop.permute.xlu0 %428
    %430 = vrot.lane.b32.xlu0 %v266, 96
    %v431 = vpop.permute.xlu0 %430
    %432 = vrot.lane.b32.xlu0 %v267, 96
    %v433 = vpop.permute.xlu0 %432
    %434 = vrot.lane.b32.xlu0 %v268, 96
    %v435 = vpop.permute.xlu0 %434
    %436 = vrot.lane.b32.xlu0 %v269, 96
    %v437 = vpop.permute.xlu0 %436
    %vm438 = vcmask 785408
    %v439 = vsel %vm438, %v429, %v431
    %v440 = vsel %vm438, %v431, %v433
    %v441 = vsel %vm438, %v433, %v435
    %v442 = vsel %vm438, %v435, %v437
    %448 = vrot.lane.b32.xlu0 %v295, 95
    %v449 = vpop.permute.xlu0 %448
    %450 = vrot.lane.b32.xlu0 %v296, 95
    %v451 = vpop.permute.xlu0 %450
    %452 = vrot.lane.b32.xlu0 %v297, 95
    %v453 = vpop.permute.xlu0 %452
    %454 = vrot.lane.b32.xlu0 %v298, 95
    %v455 = vpop.permute.xlu0 %454
    %456 = vrot.lane.b32.xlu0 %v299, 95
    %v457 = vpop.permute.xlu0 %456
    %vm458 = vcmask 777216
    %v459 = vsel %vm458, %v449, %v451
    %v460 = vsel %vm458, %v451, %v453
    %v461 = vsel %vm458, %v453, %v455
    %v462 = vsel %vm458, %v455, %v457
    %468 = vrot.lane.b32.xlu0 %v325, 94
    %v469 = vpop.permute.xlu0 %468
    %470 = vrot.lane.b32.xlu0 %v326, 94
    %v471 = vpop.permute.xlu0 %470
    %472 = vrot.lane.b32.xlu0 %v327, 94
    %v473 = vpop.permute.xlu0 %472
    %474 = vrot.lane.b32.xlu0 %v328, 94
    %v475 = vpop.permute.xlu0 %474
    %476 = vrot.lane.b32.xlu0 %v329, 94
    %v477 = vpop.permute.xlu0 %476
    %vm478 = vcmask 769024
    %v479 = vsel %vm478, %v469, %v471
    %v480 = vsel %vm478, %v471, %v473
    %v481 = vsel %vm478, %v473, %v475
    %v482 = vsel %vm478, %v475, %v477
    %v483 = vld [vmem:[%s3] sm:$0xff]
    %485 = vset.pattern.permute.xlu0 0
    %486 = vperm.xlu0 %485, %v483
    %v487 = vpop.permute.xlu0 %486
    %494 = vrot.lane.b32.xlu0 %v107, 17
    %v495 = vpop.permute.xlu0 %494
    %496 = vrot.lane.b32.xlu0 %v108, 17
    %v497 = vpop.permute.xlu0 %496
    %498 = vrot.lane.b32.xlu0 %v109, 17
    %v499 = vpop.permute.xlu0 %498
    %500 = vrot.lane.b32.xlu0 %v110, 17
    %v501 = vpop.permute.xlu0 %500
    %502 = vrot.lane.b32.xlu0 %v111, 17
    %v503 = vpop.permute.xlu0 %502
    %504 = vrot.lane.b32.xlu0 %v345, 17
    %v505 = vpop.permute.xlu0 %504
    %506 = vrot.lane.b32.xlu0 %v346, 17
    %v507 = vpop.permute.xlu0 %506
    %508 = vrot.lane.b32.xlu0 %v347, 17
    %v509 = vpop.permute.xlu0 %508
    %510 = vrot.lane.b32.xlu0 %v348, 17
    %v511 = vpop.permute.xlu0 %510
    %512 = vrot.lane.b32.xlu0 %v344, 17
    %v513 = vpop.permute.xlu0 %512
    %514 = vrot.lane.b32.xlu0 %v365, 17
    %v515 = vpop.permute.xlu0 %514
    %516 = vrot.lane.b32.xlu0 %v366, 17
    %v517 = vpop.permute.xlu0 %516
    %518 = vrot.lane.b32.xlu0 %v367, 17
    %v519 = vpop.permute.xlu0 %518
    %520 = vrot.lane.b32.xlu0 %v368, 17
    %v521 = vpop.permute.xlu0 %520
    %522 = vrot.lane.b32.xlu0 %v363, 17
    %v523 = vpop.permute.xlu0 %522
    %524 = vrot.lane.b32.xlu0 %v384, 17
    %v525 = vpop.permute.xlu0 %524
    %526 = vrot.lane.b32.xlu0 %v385, 17
    %v527 = vpop.permute.xlu0 %526
    %528 = vrot.lane.b32.xlu0 %v386, 17
    %v529 = vpop.permute.xlu0 %528
    %530 = vrot.lane.b32.xlu0 %v387, 17
    %v531 = vpop.permute.xlu0 %530
    %532 = vrot.lane.b32.xlu0 %v383, 17
    %v533 = vpop.permute.xlu0 %532
    %534 = vrot.lane.b32.xlu0 %v393, 17
    %v535 = vpop.permute.xlu0 %534
    %536 = vrot.lane.b32.xlu0 %v400, 17
    %v537 = vpop.permute.xlu0 %536
    %538 = vrot.lane.b32.xlu0 %v401, 17
    %v539 = vpop.permute.xlu0 %538
    %540 = vrot.lane.b32.xlu0 %v402, 17
    %v541 = vpop.permute.xlu0 %540
    %542 = vrot.lane.b32.xlu0 %v399, 17
    %v543 = vpop.permute.xlu0 %542
    %544 = vrot.lane.b32.xlu0 %v409, 17
    %v545 = vpop.permute.xlu0 %544
    %546 = vrot.lane.b32.xlu0 %v419, 17
    %v547 = vpop.permute.xlu0 %546
    %548 = vrot.lane.b32.xlu0 %v420, 17
    %v549 = vpop.permute.xlu0 %548
    %550 = vrot.lane.b32.xlu0 %v421, 17
    %v551 = vpop.permute.xlu0 %550
    %552 = vrot.lane.b32.xlu0 %v422, 17
    %v553 = vpop.permute.xlu0 %552
    %554 = vrot.lane.b32.xlu0 %v429, 17
    %v555 = vpop.permute.xlu0 %554
    %556 = vrot.lane.b32.xlu0 %v439, 17
    %v557 = vpop.permute.xlu0 %556
    %558 = vrot.lane.b32.xlu0 %v440, 17
    %v559 = vpop.permute.xlu0 %558
    %560 = vrot.lane.b32.xlu0 %v441, 17
    %v561 = vpop.permute.xlu0 %560
    %562 = vrot.lane.b32.xlu0 %v442, 17
    %v563 = vpop.permute.xlu0 %562
    %564 = vrot.lane.b32.xlu0 %v449, 17
    %v565 = vpop.permute.xlu0 %564
    %566 = vrot.lane.b32.xlu0 %v459, 17
    %v567 = vpop.permute.xlu0 %566
    %568 = vrot.lane.b32.xlu0 %v460, 17
    %v569 = vpop.permute.xlu0 %568
    %570 = vrot.lane.b32.xlu0 %v461, 17
    %v571 = vpop.permute.xlu0 %570
    %572 = vrot.lane.b32.xlu0 %v462, 17
    %v573 = vpop.permute.xlu0 %572
    %574 = vrot.lane.b32.xlu0 %v469, 17
    %v575 = vpop.permute.xlu0 %574
    %576 = vrot.lane.b32.xlu0 %v479, 17
    %v577 = vpop.permute.xlu0 %576
    %578 = vrot.lane.b32.xlu0 %v480, 17
    %v579 = vpop.permute.xlu0 %578
    %580 = vrot.lane.b32.xlu0 %v481, 17
    %v581 = vpop.permute.xlu0 %580
    %582 = vrot.lane.b32.xlu0 %v482, 17
    %v583 = vpop.permute.xlu0 %582
    %v584 = vsel %vm316, %v495, %v497
    %v585 = vsel %vm316, %v497, %v499
    %v586 = vsel %vm316, %v499, %v501
    %v587 = vsel %vm316, %v501, %v503
    %v588 = vsel %vm316, %v505, %v507
    %v589 = vsel %vm316, %v507, %v509
    %v590 = vsel %vm316, %v509, %v511
    %v591 = vsel %vm316, %v511, %v513
    %v592 = vsel %vm316, %v515, %v517
    %v593 = vsel %vm316, %v517, %v519
    %v594 = vsel %vm316, %v519, %v521
    %v595 = vsel %vm316, %v521, %v523
    %v596 = vsel %vm316, %v525, %v527
    %v597 = vsel %vm316, %v527, %v529
    %v598 = vsel %vm316, %v529, %v531
    %v599 = vsel %vm316, %v531, %v533
    %v600 = vsel %vm316, %v535, %v537
    %v601 = vsel %vm316, %v537, %v539
    %v602 = vsel %vm316, %v539, %v541
    %v603 = vsel %vm316, %v541, %v543
    %v604 = vsel %vm316, %v545, %v547
    %v605 = vsel %vm316, %v547, %v549
    %v606 = vsel %vm316, %v549, %v551
    %v607 = vsel %vm316, %v551, %v553
    %v608 = vsel %vm316, %v555, %v557
    %v609 = vsel %vm316, %v557, %v559
    %v610 = vsel %vm316, %v559, %v561
    %v611 = vsel %vm316, %v561, %v563
    %v612 = vsel %vm316, %v565, %v567
    %v613 = vsel %vm316, %v567, %v569
    %v614 = vsel %vm316, %v569, %v571
    %v615 = vsel %vm316, %v571, %v573
    %v616 = vsel %vm316, %v575, %v577
    %v617 = vsel %vm316, %v577, %v579
    %v618 = vsel %vm316, %v579, %v581
    %v619 = vsel %vm316, %v581, %v583
    %vm656 = vcmask 588800
    %v658 = vsel %vm656, %v77, 0
    %660 = vmatpush.msra.mxu0 0.0
    %661 = vmatpush.msra.mxu0 0.0
    %662 = vmatpush.msra.mxu0 0.0
    %663 = vmatpush.msra.mxu0 0.0
    %664 = vmatpush.msra.mxu0 0.0
    %665 = vmatpush.msra.mxu0 0.0
    %666 = vmatpush.msra.mxu0 0.0
    %667 = vmatpush.msra.mxu0 %v616
    %668 = vmatpush.msra.mxu0 %v612
    %669 = vmatpush.msra.mxu0 %v608
    %670 = vmatpush.msra.mxu0 %v604
    %671 = vmatpush.msra.mxu0 %v600
    %672 = vmatpush.msra.mxu0 %v596
    %673 = vmatpush.msra.mxu0 %v592
    %674 = vmatpush.msra.mxu0 %v588
    %675 = vmatpush.msra.mxu0 %v584
    %676 = vmatmul.f32.gmra.mxu0 %v658
    %v677 = vpop.f32.mrf.mxu0
    %v678 = vadd.f32 %v487, %v677
    %679 = vdwg.mxu0
    %680 = vmatpush.msra.mxu0 0.0
    %681 = vmatpush.msra.mxu0 0.0
    %682 = vmatpush.msra.mxu0 0.0
    %683 = vmatpush.msra.mxu0 0.0
    %684 = vmatpush.msra.mxu0 0.0
    %685 = vmatpush.msra.mxu0 0.0
    %686 = vmatpush.msra.mxu0 0.0
    %687 = vmatpush.msra.mxu0 %v617
    %688 = vmatpush.msra.mxu0 %v613
    %689 = vmatpush.msra.mxu0 %v609
    %690 = vmatpush.msra.mxu0 %v605
    %691 = vmatpush.msra.mxu0 %v601
    %692 = vmatpush.msra.mxu0 %v597
    %693 = vmatpush.msra.mxu0 %v593
    %694 = vmatpush.msra.mxu0 %v589
    %695 = vmatpush.msra.mxu0 %v585
    %696 = vmatmul.f32.gmra.mxu0 %v658
    %v697 = vpop.f32.mrf.mxu0
    %v698 = vadd.f32 %v487, %v697
    %699 = vdwg.mxu0
    %700 = vmatpush.msra.mxu0 0.0
    %701 = vmatpush.msra.mxu0 0.0
    %702 = vmatpush.msra.mxu0 0.0
    %703 = vmatpush.msra.mxu0 0.0
    %704 = vmatpush.msra.mxu0 0.0
    %705 = vmatpush.msra.mxu0 0.0
    %706 = vmatpush.msra.mxu0 0.0
    %707 = vmatpush.msra.mxu0 %v618
    %708 = vmatpush.msra.mxu0 %v614
    %709 = vmatpush.msra.mxu0 %v610
    %710 = vmatpush.msra.mxu0 %v606
    %711 = vmatpush.msra.mxu0 %v602
    %712 = vmatpush.msra.mxu0 %v598
    %713 = vmatpush.msra.mxu0 %v594
    %714 = vmatpush.msra.mxu0 %v590
    %715 = vmatpush.msra.mxu0 %v586
    %716 = vmatmul.f32.gmra.mxu0 %v658
    %v717 = vpop.f32.mrf.mxu0
    %v718 = vadd.f32 %v487, %v717
    %719 = vdwg.mxu0
    %720 = vmatpush.msra.mxu0 0.0
    %721 = vmatpush.msra.mxu0 0.0
    %722 = vmatpush.msra.mxu0 0.0
    %723 = vmatpush.msra.mxu0 0.0
    %724 = vmatpush.msra.mxu0 0.0
    %725 = vmatpush.msra.mxu0 0.0
    %726 = vmatpush.msra.mxu0 0.0
    %727 = vmatpush.msra.mxu0 %v619
    %728 = vmatpush.msra.mxu0 %v615
    %729 = vmatpush.msra.mxu0 %v611
    %730 = vmatpush.msra.mxu0 %v607
    %731 = vmatpush.msra.mxu0 %v603
    %732 = vmatpush.msra.mxu0 %v599
    %733 = vmatpush.msra.mxu0 %v595
    %734 = vmatpush.msra.mxu0 %v591
    %735 = vmatpush.msra.mxu0 %v587
    %736 = vmatmul.f32.gmra.mxu0 %v658
    %v737 = vpop.f32.mrf.mxu0
    %v738 = vadd.f32 %v487, %v737
    %739 = vdwg.mxu0
    %v740 = vmax.f32 %v678, 0.0
    %v741 = vmax.f32 %v698, 0.0
    %v742 = vmax.f32 %v718, 0.0
    %v743 = vmax.f32 %v738, 0.0
    %v744 = vld [vmem:[#allocation8] sm:$0xff]
    %v745 = vmul.f32 %v740, %v99
    %v746 = vmul.f32 %v741, %v100
    %v747 = vmul.f32 %v742, %v101
    %v748 = vmul.f32 %v743, %v97
    %v749 = vmul.f32 %v740, %v129
    %v750 = vmul.f32 %v741, %v130
    %v751 = vmul.f32 %v742, %v131
    %v752 = vmul.f32 %v743, %v127
    %v753 = vmul.f32 %v740, %v159
    %v754 = vmul.f32 %v741, %v160
    %v755 = vmul.f32 %v742, %v161
    %v756 = vmul.f32 %v743, %v157
    %v757 = vmul.f32 %v740, %v189
    %v758 = vmul.f32 %v741, %v190
    %v759 = vmul.f32 %v742, %v191
    %v760 = vmul.f32 %v743, %v187
    %v761 = vmul.f32 %v740, %v202
    %v762 = vmul.f32 %v741, %v203
    %v763 = vmul.f32 %v742, %v204
    %v764 = vmul.f32 %v743, %v205
    %v765 = vmul.f32 %v740, %v219
    %v766 = vmul.f32 %v741, %v227
    %v767 = vmul.f32 %v742, %v228
    %v768 = vmul.f32 %v743, %v229
    %v769 = vmul.f32 %v740, %v249
    %v770 = vmul.f32 %v741, %v257
    %v771 = vmul.f32 %v742, %v258
    %v772 = vmul.f32 %v743, %v259
    %v773 = vmul.f32 %v740, %v279
    %v774 = vmul.f32 %v741, %v287
    %v775 = vmul.f32 %v742, %v288
    %v776 = vmul.f32 %v743, %v289
    %v777 = vmul.f32 %v740, %v309
    %v778 = vmul.f32 %v741, %v317
    %v779 = vmul.f32 %v742, %v318
    %v780 = vmul.f32 %v743, %v319
    %785 = vrot.lane.b32.xlu0 %v749, 127
    %v786 = vpop.permute.xlu0 %785
    %787 = vrot.lane.b32.xlu0 %v750, 127
    %v788 = vpop.permute.xlu0 %787
    %789 = vrot.lane.b32.xlu0 %v751, 127
    %v790 = vpop.permute.xlu0 %789
    %791 = vrot.lane.b32.xlu0 %v752, 127
    %v792 = vpop.permute.xlu0 %791
    %v793 = vsel %vm188, %v336, %v786
    %v794 = vsel %vm188, %v786, %v788
    %v795 = vsel %vm188, %v788, %v790
    %v796 = vsel %vm188, %v790, %v792
    %801 = vrot.lane.b32.xlu0 %v753, 126
    %v802 = vpop.permute.xlu0 %801
    %803 = vrot.lane.b32.xlu0 %v754, 126
    %v804 = vpop.permute.xlu0 %803
    %805 = vrot.lane.b32.xlu0 %v755, 126
    %v806 = vpop.permute.xlu0 %805
    %807 = vrot.lane.b32.xlu0 %v756, 126
    %v808 = vpop.permute.xlu0 %807
    %v809 = vsel %vm364, %v355, %v802
    %v810 = vsel %vm364, %v802, %v804
    %v811 = vsel %vm364, %v804, %v806
    %v812 = vsel %vm364, %v806, %v808
    %817 = vrot.lane.b32.xlu0 %v757, 112
    %v818 = vpop.permute.xlu0 %817
    %819 = vrot.lane.b32.xlu0 %v758, 112
    %v820 = vpop.permute.xlu0 %819
    %821 = vrot.lane.b32.xlu0 %v759, 112
    %v822 = vpop.permute.xlu0 %821
    %823 = vrot.lane.b32.xlu0 %v760, 112
    %v824 = vpop.permute.xlu0 %823
    %v825 = vsel %vm128, %v375, %v818
    %v826 = vsel %vm128, %v818, %v820
    %v827 = vsel %vm128, %v820, %v822
    %v828 = vsel %vm128, %v822, %v824
    %833 = vrot.lane.b32.xlu0 %v761, 111
    %v834 = vpop.permute.xlu0 %833
    %835 = vrot.lane.b32.xlu0 %v762, 111
    %v836 = vpop.permute.xlu0 %835
    %837 = vrot.lane.b32.xlu0 %v763, 111
    %v838 = vpop.permute.xlu0 %837
    %839 = vrot.lane.b32.xlu0 %v764, 111
    %v840 = vpop.permute.xlu0 %839
    %v841 = vsel %vm98, %v834, %v836
    %v842 = vsel %vm98, %v836, %v838
    %v843 = vsel %vm98, %v838, %v840
    %848 = vrot.lane.b32.xlu0 %v765, 110
    %v849 = vpop.permute.xlu0 %848
    %850 = vrot.lane.b32.xlu0 %v766, 110
    %v851 = vpop.permute.xlu0 %850
    %852 = vrot.lane.b32.xlu0 %v767, 110
    %v853 = vpop.permute.xlu0 %852
    %854 = vrot.lane.b32.xlu0 %v768, 110
    %v855 = vpop.permute.xlu0 %854
    %v856 = vsel %vm418, %v849, %v851
    %v857 = vsel %vm418, %v851, %v853
    %v858 = vsel %vm418, %v853, %v855
    %v859 = vsel %vm418, %v855, %v417
    %864 = vrot.lane.b32.xlu0 %v769, 96
    %v865 = vpop.permute.xlu0 %864
    %866 = vrot.lane.b32.xlu0 %v770, 96
    %v867 = vpop.permute.xlu0 %866
    %868 = vrot.lane.b32.xlu0 %v771, 96
    %v869 = vpop.permute.xlu0 %868
    %870 = vrot.lane.b32.xlu0 %v772, 96
    %v871 = vpop.permute.xlu0 %870
    %v872 = vsel %vm438, %v865, %v867
    %v873 = vsel %vm438, %v867, %v869
    %v874 = vsel %vm438, %v869, %v871
    %v875 = vsel %vm438, %v871, %v437
    %880 = vrot.lane.b32.xlu0 %v773, 95
    %v881 = vpop.permute.xlu0 %880
    %882 = vrot.lane.b32.xlu0 %v774, 95
    %v883 = vpop.permute.xlu0 %882
    %884 = vrot.lane.b32.xlu0 %v775, 95
    %v885 = vpop.permute.xlu0 %884
    %886 = vrot.lane.b32.xlu0 %v776, 95
    %v887 = vpop.permute.xlu0 %886
    %v888 = vsel %vm458, %v881, %v883
    %v889 = vsel %vm458, %v883, %v885
    %v890 = vsel %vm458, %v885, %v887
    %v891 = vsel %vm458, %v887, %v457
    %896 = vrot.lane.b32.xlu0 %v777, 94
    %v897 = vpop.permute.xlu0 %896
    %898 = vrot.lane.b32.xlu0 %v778, 94
    %v899 = vpop.permute.xlu0 %898
    %900 = vrot.lane.b32.xlu0 %v779, 94
    %v901 = vpop.permute.xlu0 %900
    %902 = vrot.lane.b32.xlu0 %v780, 94
    %v903 = vpop.permute.xlu0 %902
    %v904 = vsel %vm478, %v897, %v899
    %v905 = vsel %vm478, %v899, %v901
    %v906 = vsel %vm478, %v901, %v903
    %v907 = vsel %vm478, %v903, %v477
    %912 = vrot.lane.b32.xlu0 %v745, 17
    %v913 = vpop.permute.xlu0 %912
    %914 = vrot.lane.b32.xlu0 %v746, 17
    %v915 = vpop.permute.xlu0 %914
    %916 = vrot.lane.b32.xlu0 %v747, 17
    %v917 = vpop.permute.xlu0 %916
    %918 = vrot.lane.b32.xlu0 %v748, 17
    %v919 = vpop.permute.xlu0 %918
    %920 = vrot.lane.b32.xlu0 %v793, 17
    %v921 = vpop.permute.xlu0 %920
    %922 = vrot.lane.b32.xlu0 %v794, 17
    %v923 = vpop.permute.xlu0 %922
    %924 = vrot.lane.b32.xlu0 %v795, 17
    %v925 = vpop.permute.xlu0 %924
    %926 = vrot.lane.b32.xlu0 %v796, 17
    %v927 = vpop.permute.xlu0 %926
    %928 = vrot.lane.b32.xlu0 %v792, 17
    %v929 = vpop.permute.xlu0 %928
    %930 = vrot.lane.b32.xlu0 %v809, 17
    %v931 = vpop.permute.xlu0 %930
    %932 = vrot.lane.b32.xlu0 %v810, 17
    %v933 = vpop.permute.xlu0 %932
    %934 = vrot.lane.b32.xlu0 %v811, 17
    %v935 = vpop.permute.xlu0 %934
    %936 = vrot.lane.b32.xlu0 %v812, 17
    %v937 = vpop.permute.xlu0 %936
    %938 = vrot.lane.b32.xlu0 %v808, 17
    %v939 = vpop.permute.xlu0 %938
    %940 = vrot.lane.b32.xlu0 %v825, 17
    %v941 = vpop.permute.xlu0 %940
    %942 = vrot.lane.b32.xlu0 %v826, 17
    %v943 = vpop.permute.xlu0 %942
    %944 = vrot.lane.b32.xlu0 %v827, 17
    %v945 = vpop.permute.xlu0 %944
    %946 = vrot.lane.b32.xlu0 %v828, 17
    %v947 = vpop.permute.xlu0 %946
    %948 = vrot.lane.b32.xlu0 %v824, 17
    %v949 = vpop.permute.xlu0 %948
    %950 = vrot.lane.b32.xlu0 %v834, 17
    %v951 = vpop.permute.xlu0 %950
    %952 = vrot.lane.b32.xlu0 %v841, 17
    %v953 = vpop.permute.xlu0 %952
    %954 = vrot.lane.b32.xlu0 %v842, 17
    %v955 = vpop.permute.xlu0 %954
    %956 = vrot.lane.b32.xlu0 %v843, 17
    %v957 = vpop.permute.xlu0 %956
    %958 = vrot.lane.b32.xlu0 %v840, 17
    %v959 = vpop.permute.xlu0 %958
    %960 = vrot.lane.b32.xlu0 %v849, 17
    %v961 = vpop.permute.xlu0 %960
    %962 = vrot.lane.b32.xlu0 %v856, 17
    %v963 = vpop.permute.xlu0 %962
    %964 = vrot.lane.b32.xlu0 %v857, 17
    %v965 = vpop.permute.xlu0 %964
    %966 = vrot.lane.b32.xlu0 %v858, 17
    %v967 = vpop.permute.xlu0 %966
    %968 = vrot.lane.b32.xlu0 %v859, 17
    %v969 = vpop.permute.xlu0 %968
    %970 = vrot.lane.b32.xlu0 %v865, 17
    %v971 = vpop.permute.xlu0 %970
    %972 = vrot.lane.b32.xlu0 %v872, 17
    %v973 = vpop.permute.xlu0 %972
    %974 = vrot.lane.b32.xlu0 %v873, 17
    %v975 = vpop.permute.xlu0 %974
    %976 = vrot.lane.b32.xlu0 %v874, 17
    %v977 = vpop.permute.xlu0 %976
    %978 = vrot.lane.b32.xlu0 %v875, 17
    %v979 = vpop.permute.xlu0 %978
    %980 = vrot.lane.b32.xlu0 %v881, 17
    %v981 = vpop.permute.xlu0 %980
    %982 = vrot.lane.b32.xlu0 %v888, 17
    %v983 = vpop.permute.xlu0 %982
    %984 = vrot.lane.b32.xlu0 %v889, 17
    %v985 = vpop.permute.xlu0 %984
    %986 = vrot.lane.b32.xlu0 %v890, 17
    %v987 = vpop.permute.xlu0 %986
    %988 = vrot.lane.b32.xlu0 %v891, 17
    %v989 = vpop.permute.xlu0 %988
    %990 = vrot.lane.b32.xlu0 %v897, 17
    %v991 = vpop.permute.xlu0 %990
    %992 = vrot.lane.b32.xlu0 %v904, 17
    %v993 = vpop.permute.xlu0 %992
    %994 = vrot.lane.b32.xlu0 %v905, 17
    %v995 = vpop.permute.xlu0 %994
    %996 = vrot.lane.b32.xlu0 %v906, 17
    %v997 = vpop.permute.xlu0 %996
    %998 = vrot.lane.b32.xlu0 %v907, 17
    %v999 = vpop.permute.xlu0 %998
    %v1000 = vsel %vm316, %v495, %v913
    %v1001 = vsel %vm316, %v913, %v915
    %v1002 = vsel %vm316, %v915, %v917
    %v1003 = vsel %vm316, %v917, %v919
    %v1004 = vsel %vm316, %v921, %v923
    %v1005 = vsel %vm316, %v923, %v925
    %v1006 = vsel %vm316, %v925, %v927
    %v1007 = vsel %vm316, %v927, %v929
    %v1008 = vsel %vm316, %v931, %v933
    %v1009 = vsel %vm316, %v933, %v935
    %v1010 = vsel %vm316, %v935, %v937
    %v1011 = vsel %vm316, %v937, %v939
    %v1012 = vsel %vm316, %v941, %v943
    %v1013 = vsel %vm316, %v943, %v945
    %v1014 = vsel %vm316, %v945, %v947
    %v1015 = vsel %vm316, %v947, %v949
    %v1016 = vsel %vm316, %v951, %v953
    %v1017 = vsel %vm316, %v953, %v955
    %v1018 = vsel %vm316, %v955, %v957
    %v1019 = vsel %vm316, %v957, %v959
    %v1020 = vsel %vm316, %v961, %v963
    %v1021 = vsel %vm316, %v963, %v965
    %v1022 = vsel %vm316, %v965, %v967
    %v1023 = vsel %vm316, %v967, %v969
    %v1024 = vsel %vm316, %v971, %v973
    %v1025 = vsel %vm316, %v973, %v975
    %v1026 = vsel %vm316, %v975, %v977
    %v1027 = vsel %vm316, %v977, %v979
    %v1028 = vsel %vm316, %v981, %v983
    %v1029 = vsel %vm316, %v983, %v985
    %v1030 = vsel %vm316, %v985, %v987
    %v1031 = vsel %vm316, %v987, %v989
    %v1032 = vsel %vm316, %v991, %v993
    %v1033 = vsel %vm316, %v993, %v995
    %v1034 = vsel %vm316, %v995, %v997
    %v1035 = vsel %vm316, %v997, %v999
    %v1073 = vsel %vm656, %v744, 0
    %1075 = vmatpush.msra.mxu0 0.0
    %1076 = vmatpush.msra.mxu0 0.0
    %1077 = vmatpush.msra.mxu0 0.0
    %1078 = vmatpush.msra.mxu0 0.0
    %1079 = vmatpush.msra.mxu0 0.0
    %1080 = vmatpush.msra.mxu0 0.0
    %1081 = vmatpush.msra.mxu0 0.0
    %1082 = vmatpush.msra.mxu0 %v1032
    %1083 = vmatpush.msra.mxu0 %v1028
    %1084 = vmatpush.msra.mxu0 %v1024
    %1085 = vmatpush.msra.mxu0 %v1020
    %1086 = vmatpush.msra.mxu0 %v1016
    %1087 = vmatpush.msra.mxu0 %v1012
    %1088 = vmatpush.msra.mxu0 %v1008
    %1089 = vmatpush.msra.mxu0 %v1004
    %1090 = vmatpush.msra.mxu0 %v1000
    %1091 = vmatmul.f32.gmra.mxu0 %v1073
    %v1092 = vpop.f32.mrf.mxu0
    %v1093 = vadd.f32 0.0, %v1092
    %1094 = vdwg.mxu0
    %1095 = vmatpush.msra.mxu0 0.0
    %1096 = vmatpush.msra.mxu0 0.0
    %1097 = vmatpush.msra.mxu0 0.0
    %1098 = vmatpush.msra.mxu0 0.0
    %1099 = vmatpush.msra.mxu0 0.0
    %1100 = vmatpush.msra.mxu0 0.0
    %1101 = vmatpush.msra.mxu0 0.0
    %1102 = vmatpush.msra.mxu0 %v1033
    %1103 = vmatpush.msra.mxu0 %v1029
    %1104 = vmatpush.msra.mxu0 %v1025
    %1105 = vmatpush.msra.mxu0 %v1021
    %1106 = vmatpush.msra.mxu0 %v1017
    %1107 = vmatpush.msra.mxu0 %v1013
    %1108 = vmatpush.msra.mxu0 %v1009
    %1109 = vmatpush.msra.mxu0 %v1005
    %1110 = vmatpush.msra.mxu0 %v1001
    %1111 = vmatmul.f32.gmra.mxu0 %v1073
    %v1112 = vpop.f32.mrf.mxu0
    %v1113 = vadd.f32 0.0, %v1112
    %1114 = vdwg.mxu0
    %1115 = vmatpush.msra.mxu0 0.0
    %1116 = vmatpush.msra.mxu0 0.0
    %1117 = vmatpush.msra.mxu0 0.0
    %1118 = vmatpush.msra.mxu0 0.0
    %1119 = vmatpush.msra.mxu0 0.0
    %1120 = vmatpush.msra.mxu0 0.0
    %1121 = vmatpush.msra.mxu0 0.0
    %1122 = vmatpush.msra.mxu0 %v1034
    %1123 = vmatpush.msra.mxu0 %v1030
    %1124 = vmatpush.msra.mxu0 %v1026
    %1125 = vmatpush.msra.mxu0 %v1022
    %1126 = vmatpush.msra.mxu0 %v1018
    %1127 = vmatpush.msra.mxu0 %v1014
    %1128 = vmatpush.msra.mxu0 %v1010
    %1129 = vmatpush.msra.mxu0 %v1006
    %1130 = vmatpush.msra.mxu0 %v1002
    %1131 = vmatmul.f32.gmra.mxu0 %v1073
    %v1132 = vpop.f32.mrf.mxu0
    %v1133 = vadd.f32 0.0, %v1132
    %1134 = vdwg.mxu0
    %1135 = vmatpush.msra.mxu0 0.0
    %1136 = vmatpush.msra.mxu0 0.0
    %1137 = vmatpush.msra.mxu0 0.0
    %1138 = vmatpush.msra.mxu0 0.0
    %1139 = vmatpush.msra.mxu0 0.0
    %1140 = vmatpush.msra.mxu0 0.0
    %1141 = vmatpush.msra.mxu0 0.0
    %1142 = vmatpush.msra.mxu0 %v1035
    %1143 = vmatpush.msra.mxu0 %v1031
    %1144 = vmatpush.msra.mxu0 %v1027
    %1145 = vmatpush.msra.mxu0 %v1023
    %1146 = vmatpush.msra.mxu0 %v1019
    %1147 = vmatpush.msra.mxu0 %v1015
    %1148 = vmatpush.msra.mxu0 %v1011
    %1149 = vmatpush.msra.mxu0 %v1007
    %1150 = vmatpush.msra.mxu0 %v1003
    %1151 = vmatmul.f32.gmra.mxu0 %v1073
    %v1152 = vpop.f32.mrf.mxu0
    %v1153 = vadd.f32 0.0, %v1152
    %1154 = vdwg.mxu0
    %v1155 = vadd.f32 %v1093, %v1133
    %v1156 = vadd.f32 %v1113, %v1153
    %v1157 = vmul.f32 %v1155, 0.5
    %v1158 = vmul.f32 %v1156, 0.5
    %v1159 = vld [vmem:[#allocation2] sm:$0x1]
    %1161 = vset.pattern.permute.xlu0 0
    %1162 = vperm.xlu0 %1161, %v1159
    %v1163 = vpop.permute.xlu0 %1162
    %v1165 = vperm.slane %v1163, 0
    %v1166 = vadd.f32 %v1157, %v1165
    %v1167 = vadd.f32 %v1158, %v1165
    %v1170 = vrot.slane %v1167, 7
    %vm1171 = vcmask 1040384
    %v1172 = vsel %vm1171, %v1166, %v1170
    %v1174 = vlaneseq
    %vm1175 = vcmp.ge.s32.totalorder %v1174, 0
    %vm1176 = vcmp.lt.s32.totalorder %v1174, 256
    %vm1177 = vmand %vm1175, %vm1176
    %1178 = vst.msk [vmem:[#allocation9] sm:$0x3] %vm1177, %v1172
    // Predicated region
    $region38: #{tpu_custom_call.1} parent=1 // pred_check
      _
    $region39: #{tpu_custom_call.1} parent=1 // pred_check_branch
      %1180 = sbr.rel (0) target = $region41
    $region40: #{tpu_custom_call.1} parent=1 // pred_region
      %1182 = vsyncadd [#allocation5], 0
      %s1184 = sshll.u32 [#allocation9], 4
      %s1185 = int_to_ptr.vmem [resolvable:$true] %s1184
      %s1186 = sshll.u32 %s6, 4
      %s1187 = int_to_ptr.hbm [resolvable:$true] %s1186
      %1189 = dma.vmem_to_hbm [thread:$0]  %s1185, 32, %s1187, [#allocation5]
    $region41: #{tpu_custom_call.1} parent=1 // pred_fallthru
      _
    // Predicated region
    $region42: #{tpu_custom_call.1} parent=1 // pred_check
      _
    $region43: #{tpu_custom_call.1} parent=1 // pred_check_branch
      %1191 = sbr.rel (0) target = $region45
    $region44: #{tpu_custom_call.1} parent=1 // pred_region
      %1193 = dma.done [#allocation5], 32
    $region45: #{tpu_custom_call.1} parent=1 // pred_fallthru
      _
    %1194 = vsyncpa [#allocation4], 1
    %1195 = vsyncpa [#allocation7], 1
    %1196 = vsyncpa [#allocation5], 1

</llo_original>
